<compile_context>
chip_gen: v7x
topology: tpu7x:2x2x1
jax: 0.10.0
libtpu: 0.0.40
codegen_flags: <defaults>
</compile_context>

<pallas_src>
import jax
import jax.numpy as jnp
from jax import lax
from jax.experimental import pallas as pl
from jax.experimental.pallas import tpu as pltpu


def _vmem_capacity_bytes():
    """Physical VMEM of the local TPU; conservative (v7x) fallback if unknown."""
    try:
        info = pltpu.get_tpu_info()
        cap = getattr(info, "vmem_capacity_bytes", None)
        if cap:
            return int(cap)
    except Exception:
        pass
    return 64 * 1024 * 1024


def _choose_tile_h(H, W, C, ifa_channels, bytes_per_elem):
    """Largest tile_h (multiple of 8 dividing H) whose double-buffered input
    streams + f32 temporaries fit a generation-aware VMEM budget."""
    cap = _vmem_capacity_bytes()
    # ~55% of physical VMEM for the pipelined input buffers, hard-capped at 44 MiB
    # so a tile sized for v5e/v6e (128 MiB) never overflows v7x (64 MiB).
    budget = min(int(cap * 0.55), 44 * 1024 * 1024)
    # Per h-row: 2x-buffered input streams + ~10 rows of in-kernel f32 temporaries.
    row_bytes = 2 * (4 * C + ifa_channels) * W * bytes_per_elem + 10 * W * 4
    max_th = max(8, budget // max(row_bytes, 1))
    th = min(H, max_th)
    th -= th % 8
    while th >= 8:
        if H % th == 0:
            return th
        th -= 8
    # TODO(synk): tail-masked h tiles for H not divisible by 8 (full-H fallback).
    return H


def _fold8(x):
    """(rows, w) f32 -> (8, w) partial whose total sum equals x.sum()."""
    rows, w = x.shape
    if rows == 8:
        return x
    if rows % 8 == 0:
        return jnp.sum(x.reshape(rows // 8, 8, w), axis=0)
    s = jnp.sum(x, axis=0, keepdims=True)                      # (1, w)
    sub = lax.broadcasted_iota(jnp.int32, (8, w), 0)
    return jnp.where(sub == 0, s, jnp.zeros((8, w), jnp.float32))


def _make_kernel(C, TH, W, ifa_has_c):
    aligned = (TH % 8 == 0) and (W % 128 == 0)

    def kernel(out_ref, gt_ref, est_ref, gtn_ref, ifa_ref, partial_ref, carry_ref):
        h = pl.program_id(2)

        @pl.when(h == 0)
        def _init():
            partial_ref[...] = jnp.zeros_like(partial_ref)
            # Seam row "above" the first tile := its own first row -> zero seam term.
            carry_ref[...] = est_ref[:, 0:1, :].astype(jnp.float32)

        sub8 = lax.broadcasted_iota(jnp.int32, (8, W), 0)
        lane8 = lax.broadcasted_iota(jnp.int32, (8, W), 1)

        acc_fused = jnp.zeros((8, W), jnp.float32)
        acc_tvh = jnp.zeros((8, W), jnp.float32)
        corr_h = jnp.zeros((1, W), jnp.float32)
        if aligned:
            acc_tvw = jnp.zeros((8, W), jnp.float32)
            corr_w = jnp.zeros((8, 1), jnp.float32)
        else:
            acc_tvw = jnp.zeros((8, W - 1), jnp.float32)

        ifa_shared = None
        if not ifa_has_c:
            ifa_shared = ifa_ref[0].astype(jnp.float32)        # (TH, W), reused per c

        for c in range(C):                                      # static unroll over C
            out = out_ref[c].astype(jnp.float32)               # (TH, W)
            gt = gt_ref[c].astype(jnp.float32)
            est = est_ref[c].astype(jnp.float32)
            gtn = gtn_ref[c].astype(jnp.float32)
            ifa = ifa_ref[c].astype(jnp.float32) if ifa_has_c else ifa_shared

            # ---- fused MSE + 0.5 * asymmetric loss (same n_total denominator)
            d = out - gt
            nd = est - gtn
            wgt = jnp.where(gtn < est, 0.7, 0.3)
            acc_fused = acc_fused + _fold8(d * d + (0.5 * ifa) * wgt * (nd * nd))

            # ---- TV terms
            seam = est[0:1, :] - carry_ref[c]                  # row above this tile
            if aligned:
                # Circular roll (XLU): the multiset of squared diffs is the
                # within-tile adjacent pairs + one wrap pair, under either roll
                # sign convention.  Subtract the wrap pair, add the seam pair.
                dh = pltpu.roll(est, 1, 0) - est
                acc_tvh = acc_tvh + _fold8(dh * dh)
                wrap_h = est[0:1, :] - est[TH - 1:TH, :]
                corr_h = corr_h + (seam * seam - wrap_h * wrap_h)

                dw = pltpu.roll(est, 1, 1) - est
                acc_tvw = acc_tvw + _fold8(dw * dw)
                wrap_w = est[:, 0:1] - est[:, W - 1:W]
                corr_w = corr_w + _fold8(wrap_w * wrap_w)
            else:
                # TODO(synk): pad W to a lane multiple / mask odd h-tails; this
                # fallback keeps the (copying) slice-based diffs for odd shapes.
                dh = est[1:, :] - est[:TH - 1, :]
                corr_h = corr_h + jnp.sum(dh * dh, axis=0, keepdims=True)
                corr_h = corr_h + seam * seam
                dw = est[:, 1:] - est[:, :W - 1]
                acc_tvw = acc_tvw + _fold8(dw * dw)

            # Stash this tile's last est row for the next h step.
            carry_ref[c] = est[TH - 1:TH, :]

        partial_ref[0] = partial_ref[0] + acc_fused
        partial_ref[1] = partial_ref[1] + acc_tvh + jnp.where(sub8 == 0, corr_h, 0.0)
        if aligned:
            partial_ref[2] = partial_ref[2] + acc_tvw - jnp.where(lane8 == 0, corr_w, 0.0)
        else:
            partial_ref[2, :, :W - 1] = partial_ref[2, :, :W - 1] + acc_tvw

    return kernel


def fixed_loss(out_image, gt_image, est_noise, gt_noise, if_asym, *, tile_h=None):
    """Pallas implementation of CBDNet fixed_loss.forward. Returns scalar f32."""
    B, C, H, W = est_noise.shape
    assert out_image.shape == (B, C, H, W) and gt_image.shape == (B, C, H, W)
    assert gt_noise.shape == (B, C, H, W)
    assert H >= 2 and W >= 2, "TV loss needs H >= 2 and W >= 2"

    # Keep if_asym at channel-width 1 when possible (no HBM broadcast over C).
    ifa = jnp.asarray(if_asym)
    if not jnp.issubdtype(ifa.dtype, jnp.floating):
        ifa = ifa.astype(jnp.float32)
    if ifa.ndim == 4 and ifa.shape == (B, C, H, W) and C > 1:
        ifa_has_c = True
    else:
        ifa = jnp.broadcast_to(ifa, (B, 1, H, W))
        ifa_has_c = False
    ifa_c = C if ifa_has_c else 1

    # v7x megacore: when B == 1 there is no parallel work, so split H into two
    # independent halves (pure no-op on single-TC v5e/v6e).  The one missing
    # seam row between the halves is added in the JAX epilogue below.
    split = (B == 1) and (H % 2 == 0) and (H >= 16)
    S = 2 if split else 1
    H_eff = H // S

    bpe = max(jnp.dtype(x.dtype).itemsize
              for x in (out_image, gt_image, est_noise, gt_noise, ifa))
    if tile_h is None:
        tile_h = _choose_tile_h(H_eff, W, C, ifa_c, bpe)
    assert H_eff % tile_h == 0, f"tile_h={tile_h} must divide H_eff={H_eff}"
    n_h = H_eff // tile_h

    def data_idx(b, s, h):
        return (b, 0, s * n_h + h, 0)

    data_spec = pl.BlockSpec((None, C, tile_h, W), data_idx)
    ifa_spec = data_spec if ifa_has_c else pl.BlockSpec((None, 1, tile_h, W), data_idx)
    out_spec = pl.BlockSpec((None, None, 3, 8, W), lambda b, s, h: (b, s, 0, 0, 0))

    kernel = _make_kernel(C, tile_h, W, ifa_has_c)

    vmem_cap = _vmem_capacity_bytes()
    vmem_limit = min(int(vmem_cap * 0.9), 112 * 1024 * 1024)

    bytes_accessed = int(
        sum(int(x.size) * jnp.dtype(x.dtype).itemsize
            for x in (out_image, gt_image, est_noise, gt_noise, ifa))
        + B * S * 3 * 8 * W * 4)
    cost = pl.CostEstimate(flops=int(20 * B * C * H * W), transcendentals=0,
                           bytes_accessed=bytes_accessed)

    # TODO(synk): if a trace still shows exposed DMA with bf16 inputs, sweep
    # pipeline_mode=pl.Buffered(3) on the four full-rate data specs.
    partials = pl.pallas_call(
        kernel,
        out_shape=jax.ShapeDtypeStruct((B, S, 3, 8, W), jnp.float32),
        grid_spec=pltpu.PrefetchScalarGridSpec(
            num_scalar_prefetch=0,
            grid=(B, S, n_h),
            in_specs=[data_spec, data_spec, data_spec, data_spec, ifa_spec],
            out_specs=out_spec,
            scratch_shapes=[pltpu.VMEM((C, 1, W), jnp.float32)],
        ),
        compiler_params=pltpu.CompilerParams(
            dimension_semantics=("parallel", "parallel", "arbitrary"),
            vmem_limit_bytes=vmem_limit),
        cost_estimate=cost,
    )(out_image, gt_image, est_noise, gt_noise, ifa)

    # Tiny JAX epilogue: reduce the (B, S, 3, 8, W) partials and normalize.
    sums = jnp.sum(partials, axis=(0, 1, 3, 4))                 # (3,)
    fused_sum, h_tv, w_tv = sums[0], sums[1], sums[2]
    if S == 2:
        mid = H // 2
        top = est_noise[:, :, mid, :].astype(jnp.float32)
        bot = est_noise[:, :, mid - 1, :].astype(jnp.float32)
        h_tv = h_tv + jnp.sum((top - bot) ** 2)                 # seam between halves

    n_total = float(B * C * H * W)
    count_h = float(C * (H - 1) * W)
    count_w = float(C * H * (W - 1))
    tvloss = h_tv / count_h + w_tv / count_w
    return fused_sum / n_total + 0.05 * tvloss


def _reference(out_image, gt_image, est_noise, gt_noise, if_asym):
    """Pure-JAX reference mirroring the PyTorch module exactly."""
    l2_loss = jnp.mean((out_image - gt_image) ** 2)
    lt = (gt_noise < est_noise).astype(jnp.float32)
    asym_loss = jnp.mean(if_asym * jnp.abs(0.3 - lt) * (est_noise - gt_noise) ** 2)
    _, C, H, W = est_noise.shape
    count_h = C * (H - 1) * W
    count_w = C * H * (W - 1)
    h_tv = jnp.sum((est_noise[:, :, 1:, :] - est_noise[:, :, :H - 1, :]) ** 2)
    w_tv = jnp.sum((est_noise[:, :, :, 1:] - est_noise[:, :, :, :W - 1]) ** 2)
    tvloss = h_tv / count_h + w_tv / count_w
    return l2_loss + 0.5 * asym_loss + 0.05 * tvloss


if __name__ == "__main__":
    key = jax.random.PRNGKey(0)
    k1, k2, k3, k4, k5 = jax.random.split(key, 5)

    B, C, H, W = 2, 3, 16, 128
    out_image = jax.random.normal(k1, (B, C, H, W), dtype=jnp.float32)
    gt_image = jax.random.normal(k2, (B, C, H, W), dtype=jnp.float32)
    est_noise = jax.random.uniform(k3, (B, C, H, W), dtype=jnp.float32)
    gt_noise = jax.random.uniform(k4, (B, C, H, W), dtype=jnp.float32)
    # Per-pixel 0/1 asym mask, shape (B,1,H,W), broadcast over channels.
    if_asym = (jax.random.uniform(k5, (B, 1, H, W)) > 0.5).astype(jnp.float32)

    ref = _reference(out_image, gt_image, est_noise, gt_noise, if_asym)

    # (1) Multi-tile path: exercises the carried seam row + h accumulation.
    loss_tiled = fixed_loss(out_image, gt_image, est_noise, gt_noise, if_asym, tile_h=8)
    loss_tiled = jax.block_until_ready(loss_tiled)
    assert jnp.allclose(loss_tiled, ref, rtol=1e-5, atol=1e-6), (loss_tiled, ref)

    # (2) Auto tile size (single full-H tile at these shapes).
    loss_auto = jax.block_until_ready(
        fixed_loss(out_image, gt_image, est_noise, gt_noise, if_asym))
    assert jnp.allclose(loss_auto, ref, rtol=1e-5, atol=1e-6), (loss_auto, ref)

    # (3) B == 1: exercises the two-way H split (v7x megacore) + epilogue seam.
    ref1 = _reference(out_image[:1], gt_image[:1], est_noise[:1],
                      gt_noise[:1], if_asym[:1])
    loss_b1 = jax.block_until_ready(
        fixed_loss(out_image[:1], gt_image[:1], est_noise[:1],
                   gt_noise[:1], if_asym[:1]))
    assert jnp.allclose(loss_b1, ref1, rtol=1e-5, atol=1e-6), (loss_b1, ref1)

    print("KERNEL_OK")
</pallas_src>

<mosaic_0001>
module attributes {stable_mosaic.version = 11 : i64} {
  func.func @kernel(%arg0: i32, %arg1: i32, %arg2: i32, %arg3: memref<1x3x8x128xf32, #tpu.memory_space<vmem>>, %arg4: memref<1x3x8x128xf32, #tpu.memory_space<vmem>>, %arg5: memref<1x3x8x128xf32, #tpu.memory_space<vmem>>, %arg6: memref<1x3x8x128xf32, #tpu.memory_space<vmem>>, %arg7: memref<1x1x8x128xf32, #tpu.memory_space<vmem>>, %arg8: memref<1x1x3x8x128xf32, #tpu.memory_space<vmem>>, %arg9: memref<3x1x128xf32, #tpu.memory_space<vmem>>) attributes {dimension_semantics = [#tpu.dimension_semantics<parallel>, #tpu.dimension_semantics<parallel>, #tpu.dimension_semantics<arbitrary>], iteration_bounds = array<i64: 2, 1, 2>, scalar_prefetch = 0 : i64, scratch_operands = 1 : i64, tpu.core_type = #tpu.core_type<tc>, window_params = [{transform_indices = @transform_0, window_bounds = array<i64: 1, 3, 8, 128>}, {transform_indices = @transform_1, window_bounds = array<i64: 1, 3, 8, 128>}, {transform_indices = @transform_2, window_bounds = array<i64: 1, 3, 8, 128>}, {transform_indices = @transform_3, window_bounds = array<i64: 1, 3, 8, 128>}, {transform_indices = @transform_4, window_bounds = array<i64: 1, 1, 8, 128>}, {transform_indices = @transform_5, window_bounds = array<i64: 1, 1, 3, 8, 128>}]} {
    %c0_i32 = arith.constant 0 : i32
    %0 = arith.cmpi eq, %arg2, %c0_i32 : i32
    %1 = arith.extui %0 : i1 to i32
    %c0_i32_0 = arith.constant 0 : i32
    %2 = arith.cmpi ne, %1, %c0_i32_0 : i32
    scf.if %2 {
      %cst_120 = arith.constant 0.000000e+00 : f32
      %194 = vector.broadcast %cst_120 : f32 to vector<3x8x128xf32>
      %c0_121 = arith.constant 0 : index
      %c0_122 = arith.constant 0 : index
      %c0_123 = arith.constant 0 : index
      %c0_124 = arith.constant 0 : index
      %c0_125 = arith.constant 0 : index
      %195 = vector.load %arg8[%c0_121, %c0_122, %c0_123, %c0_124, %c0_125] : memref<1x1x3x8x128xf32, #tpu.memory_space<vmem>>, vector<1x1x3x8x128xf32>
      %196 = vector.shape_cast %195 : vector<1x1x3x8x128xf32> to vector<3x8x128xf32>
      %197 = vector.shape_cast %194 : vector<3x8x128xf32> to vector<1x1x3x8x128xf32>
      tpu.vector_store %arg8[%c0_121, %c0_122, %c0_123, %c0_124, %c0_125], %197 {strides = array<i32>} : memref<1x1x3x8x128xf32, #tpu.memory_space<vmem>>, vector<1x1x3x8x128xf32>,
      %c0_126 = arith.constant 0 : index
      %c0_127 = arith.constant 0 : index
      %c0_128 = arith.constant 0 : index
      %c0_129 = arith.constant 0 : index
      %198 = vector.load %arg5[%c0_126, %c0_127, %c0_128, %c0_129] : memref<1x3x8x128xf32, #tpu.memory_space<vmem>>, vector<1x3x1x128xf32>
      %199 = vector.shape_cast %198 : vector<1x3x1x128xf32> to vector<3x1x128xf32>
      %c0_130 = arith.constant 0 : index
      %c0_131 = arith.constant 0 : index
      %c0_132 = arith.constant 0 : index
      %200 = vector.load %arg9[%c0_130, %c0_131, %c0_132] : memref<3x1x128xf32, #tpu.memory_space<vmem>>, vector<3x1x128xf32>
      tpu.vector_store %arg9[%c0_130, %c0_131, %c0_132], %199 {strides = array<i32>} : memref<3x1x128xf32, #tpu.memory_space<vmem>>, vector<3x1x128xf32>,
    } else {
    }
    %3 = tpu.iota {dimensions = array<i32: 0>} : vector<8x128xi32>
    %4 = tpu.iota {dimensions = array<i32: 1>} : vector<8x128xi32>
    %cst = arith.constant 0.000000e+00 : f32
    %5 = vector.broadcast %cst : f32 to vector<8x128xf32>
    %cst_1 = arith.constant 0.000000e+00 : f32
    %6 = vector.broadcast %cst_1 : f32 to vector<8x128xf32>
    %cst_2 = arith.constant 0.000000e+00 : f32
    %7 = vector.broadcast %cst_2 : f32 to vector<1x128xf32>
    %cst_3 = arith.constant 0.000000e+00 : f32
    %8 = vector.broadcast %cst_3 : f32 to vector<8x128xf32>
    %cst_4 = arith.constant 0.000000e+00 : f32
    %9 = vector.broadcast %cst_4 : f32 to vector<8x1xf32>
    %c0 = arith.constant 0 : index
    %c0_5 = arith.constant 0 : index
    %c0_6 = arith.constant 0 : index
    %c0_7 = arith.constant 0 : index
    %10 = vector.load %arg7[%c0, %c0_5, %c0_6, %c0_7] : memref<1x1x8x128xf32, #tpu.memory_space<vmem>>, vector<1x1x8x128xf32>
    %11 = vector.shape_cast %10 : vector<1x1x8x128xf32> to vector<8x128xf32>
    %c0_8 = arith.constant 0 : index
    %c0_9 = arith.constant 0 : index
    %c0_10 = arith.constant 0 : index
    %c0_11 = arith.constant 0 : index
    %12 = vector.load %arg3[%c0_8, %c0_9, %c0_10, %c0_11] : memref<1x3x8x128xf32, #tpu.memory_space<vmem>>, vector<1x1x8x128xf32>
    %13 = vector.shape_cast %12 : vector<1x1x8x128xf32> to vector<8x128xf32>
    %c0_12 = arith.constant 0 : index
    %c0_13 = arith.constant 0 : index
    %c0_14 = arith.constant 0 : index
    %c0_15 = arith.constant 0 : index
    %14 = vector.load %arg4[%c0_12, %c0_13, %c0_14, %c0_15] : memref<1x3x8x128xf32, #tpu.memory_space<vmem>>, vector<1x1x8x128xf32>
    %15 = vector.shape_cast %14 : vector<1x1x8x128xf32> to vector<8x128xf32>
    %c0_16 = arith.constant 0 : index
    %c0_17 = arith.constant 0 : index
    %c0_18 = arith.constant 0 : index
    %c0_19 = arith.constant 0 : index
    %16 = vector.load %arg5[%c0_16, %c0_17, %c0_18, %c0_19] : memref<1x3x8x128xf32, #tpu.memory_space<vmem>>, vector<1x1x8x128xf32>
    %17 = vector.shape_cast %16 : vector<1x1x8x128xf32> to vector<8x128xf32>
    %c0_20 = arith.constant 0 : index
    %c0_21 = arith.constant 0 : index
    %c0_22 = arith.constant 0 : index
    %c0_23 = arith.constant 0 : index
    %18 = vector.load %arg6[%c0_20, %c0_21, %c0_22, %c0_23] : memref<1x3x8x128xf32, #tpu.memory_space<vmem>>, vector<1x1x8x128xf32>
    %19 = vector.shape_cast %18 : vector<1x1x8x128xf32> to vector<8x128xf32>
    %20 = arith.subf %13, %15 : vector<8x128xf32>
    %21 = arith.subf %17, %19 : vector<8x128xf32>
    %22 = arith.cmpf olt, %19, %17 : vector<8x128xf32>
    %cst_24 = arith.constant 0.699999988 : f32
    %cst_25 = arith.constant 3.000000e-01 : f32
    %23 = vector.broadcast %cst_24 : f32 to vector<8x128xf32>
    %24 = vector.broadcast %cst_25 : f32 to vector<8x128xf32>
    %25 = arith.select %22, %23, %24 : vector<8x128xi1>, vector<8x128xf32>
    %26 = arith.mulf %20, %20 : vector<8x128xf32>
    %cst_26 = arith.constant 5.000000e-01 : f32
    %27 = vector.broadcast %cst_26 : f32 to vector<8x128xf32>
    %28 = arith.mulf %27, %11 : vector<8x128xf32>
    %29 = arith.mulf %28, %25 : vector<8x128xf32>
    %30 = arith.mulf %21, %21 : vector<8x128xf32>
    %31 = arith.mulf %29, %30 : vector<8x128xf32>
    %32 = arith.addf %26, %31 : vector<8x128xf32>
    %33 = arith.addf %5, %32 : vector<8x128xf32>
    %34 = vector.extract_strided_slice %17 {offsets = [0, 0], sizes = [1, 128], strides = [1, 1]} : vector<8x128xf32> to vector<1x128xf32>
    %c0_27 = arith.constant 0 : index
    %c0_28 = arith.constant 0 : index
    %c0_29 = arith.constant 0 : index
    %35 = vector.load %arg9[%c0_27, %c0_28, %c0_29] : memref<3x1x128xf32, #tpu.memory_space<vmem>>, vector<1x1x128xf32>
    %36 = vector.shape_cast %35 : vector<1x1x128xf32> to vector<1x128xf32>
    %37 = arith.subf %34, %36 : vector<1x128xf32>
    %c1_i32 = arith.constant 1 : i32
    %38 = tpu.dynamic_rotate %17 by %c1_i32 dim 0 : vector<8x128xf32>, i32 -> vector<8x128xf32>
    %39 = arith.subf %38, %17 : vector<8x128xf32>
    %40 = arith.mulf %39, %39 : vector<8x128xf32>
    %41 = arith.addf %6, %40 : vector<8x128xf32>
    %42 = vector.extract_strided_slice %17 {offsets = [0, 0], sizes = [1, 128], strides = [1, 1]} : vector<8x128xf32> to vector<1x128xf32>
    %43 = vector.extract_strided_slice %17 {offsets = [7, 0], sizes = [1, 128], strides = [1, 1]} : vector<8x128xf32> to vector<1x128xf32>
    %44 = arith.subf %42, %43 : vector<1x128xf32>
    %45 = arith.mulf %37, %37 : vector<1x128xf32>
    %46 = arith.mulf %44, %44 : vector<1x128xf32>
    %47 = arith.subf %45, %46 : vector<1x128xf32>
    %48 = arith.addf %7, %47 : vector<1x128xf32>
    %c1_i32_30 = arith.constant 1 : i32
    %49 = tpu.dynamic_rotate %17 by %c1_i32_30 dim 1 : vector<8x128xf32>, i32 -> vector<8x128xf32>
    %50 = arith.subf %49, %17 : vector<8x128xf32>
    %51 = arith.mulf %50, %50 : vector<8x128xf32>
    %52 = arith.addf %8, %51 : vector<8x128xf32>
    %53 = vector.extract_strided_slice %17 {offsets = [0, 0], sizes = [8, 1], strides = [1, 1]} : vector<8x128xf32> to vector<8x1xf32>
    %54 = vector.extract_strided_slice %17 {offsets = [0, 127], sizes = [8, 1], strides = [1, 1]} : vector<8x128xf32> to vector<8x1xf32>
    %55 = arith.subf %53, %54 : vector<8x1xf32>
    %56 = arith.mulf %55, %55 : vector<8x1xf32>
    %57 = arith.addf %9, %56 : vector<8x1xf32>
    %58 = vector.extract_strided_slice %17 {offsets = [7, 0], sizes = [1, 128], strides = [1, 1]} : vector<8x128xf32> to vector<1x128xf32>
    %c0_31 = arith.constant 0 : index
    %c0_32 = arith.constant 0 : index
    %c0_33 = arith.constant 0 : index
    %59 = vector.load %arg9[%c0_31, %c0_32, %c0_33] : memref<3x1x128xf32, #tpu.memory_space<vmem>>, vector<1x1x128xf32>
    %60 = vector.shape_cast %59 : vector<1x1x128xf32> to vector<1x128xf32>
    %61 = vector.shape_cast %58 : vector<1x128xf32> to vector<1x1x128xf32>
    tpu.vector_store %arg9[%c0_31, %c0_32, %c0_33], %61 {strides = array<i32>} : memref<3x1x128xf32, #tpu.memory_space<vmem>>, vector<1x1x128xf32>,
    %c0_34 = arith.constant 0 : index
    %c1 = arith.constant 1 : index
    %c0_35 = arith.constant 0 : index
    %c0_36 = arith.constant 0 : index
    %62 = vector.load %arg3[%c0_34, %c1, %c0_35, %c0_36] : memref<1x3x8x128xf32, #tpu.memory_space<vmem>>, vector<1x1x8x128xf32>
    %63 = vector.shape_cast %62 : vector<1x1x8x128xf32> to vector<8x128xf32>
    %c0_37 = arith.constant 0 : index
    %c1_38 = arith.constant 1 : index
    %c0_39 = arith.constant 0 : index
    %c0_40 = arith.constant 0 : index
    %64 = vector.load %arg4[%c0_37, %c1_38, %c0_39, %c0_40] : memref<1x3x8x128xf32, #tpu.memory_space<vmem>>, vector<1x1x8x128xf32>
    %65 = vector.shape_cast %64 : vector<1x1x8x128xf32> to vector<8x128xf32>
    %c0_41 = arith.constant 0 : index
    %c1_42 = arith.constant 1 : index
    %c0_43 = arith.constant 0 : index
    %c0_44 = arith.constant 0 : index
    %66 = vector.load %arg5[%c0_41, %c1_42, %c0_43, %c0_44] : memref<1x3x8x128xf32, #tpu.memory_space<vmem>>, vector<1x1x8x128xf32>
    %67 = vector.shape_cast %66 : vector<1x1x8x128xf32> to vector<8x128xf32>
    %c0_45 = arith.constant 0 : index
    %c1_46 = arith.constant 1 : index
    %c0_47 = arith.constant 0 : index
    %c0_48 = arith.constant 0 : index
    %68 = vector.load %arg6[%c0_45, %c1_46, %c0_47, %c0_48] : memref<1x3x8x128xf32, #tpu.memory_space<vmem>>, vector<1x1x8x128xf32>
    %69 = vector.shape_cast %68 : vector<1x1x8x128xf32> to vector<8x128xf32>
    %70 = arith.subf %63, %65 : vector<8x128xf32>
    %71 = arith.subf %67, %69 : vector<8x128xf32>
    %72 = arith.cmpf olt, %69, %67 : vector<8x128xf32>
    %cst_49 = arith.constant 0.699999988 : f32
    %cst_50 = arith.constant 3.000000e-01 : f32
    %73 = vector.broadcast %cst_49 : f32 to vector<8x128xf32>
    %74 = vector.broadcast %cst_50 : f32 to vector<8x128xf32>
    %75 = arith.select %72, %73, %74 : vector<8x128xi1>, vector<8x128xf32>
    %76 = arith.mulf %70, %70 : vector<8x128xf32>
    %cst_51 = arith.constant 5.000000e-01 : f32
    %77 = vector.broadcast %cst_51 : f32 to vector<8x128xf32>
    %78 = arith.mulf %77, %11 : vector<8x128xf32>
    %79 = arith.mulf %78, %75 : vector<8x128xf32>
    %80 = arith.mulf %71, %71 : vector<8x128xf32>
    %81 = arith.mulf %79, %80 : vector<8x128xf32>
    %82 = arith.addf %76, %81 : vector<8x128xf32>
    %83 = arith.addf %33, %82 : vector<8x128xf32>
    %84 = vector.extract_strided_slice %67 {offsets = [0, 0], sizes = [1, 128], strides = [1, 1]} : vector<8x128xf32> to vector<1x128xf32>
    %c1_52 = arith.constant 1 : index
    %c0_53 = arith.constant 0 : index
    %c0_54 = arith.constant 0 : index
    %85 = vector.load %arg9[%c1_52, %c0_53, %c0_54] : memref<3x1x128xf32, #tpu.memory_space<vmem>>, vector<1x1x128xf32>
    %86 = vector.shape_cast %85 : vector<1x1x128xf32> to vector<1x128xf32>
    %87 = arith.subf %84, %86 : vector<1x128xf32>
    %c1_i32_55 = arith.constant 1 : i32
    %88 = tpu.dynamic_rotate %67 by %c1_i32_55 dim 0 : vector<8x128xf32>, i32 -> vector<8x128xf32>
    %89 = arith.subf %88, %67 : vector<8x128xf32>
    %90 = arith.mulf %89, %89 : vector<8x128xf32>
    %91 = arith.addf %41, %90 : vector<8x128xf32>
    %92 = vector.extract_strided_slice %67 {offsets = [0, 0], sizes = [1, 128], strides = [1, 1]} : vector<8x128xf32> to vector<1x128xf32>
    %93 = vector.extract_strided_slice %67 {offsets = [7, 0], sizes = [1, 128], strides = [1, 1]} : vector<8x128xf32> to vector<1x128xf32>
    %94 = arith.subf %92, %93 : vector<1x128xf32>
    %95 = arith.mulf %87, %87 : vector<1x128xf32>
    %96 = arith.mulf %94, %94 : vector<1x128xf32>
    %97 = arith.subf %95, %96 : vector<1x128xf32>
    %98 = arith.addf %48, %97 : vector<1x128xf32>
    %c1_i32_56 = arith.constant 1 : i32
    %99 = tpu.dynamic_rotate %67 by %c1_i32_56 dim 1 : vector<8x128xf32>, i32 -> vector<8x128xf32>
    %100 = arith.subf %99, %67 : vector<8x128xf32>
    %101 = arith.mulf %100, %100 : vector<8x128xf32>
    %102 = arith.addf %52, %101 : vector<8x128xf32>
    %103 = vector.extract_strided_slice %67 {offsets = [0, 0], sizes = [8, 1], strides = [1, 1]} : vector<8x128xf32> to vector<8x1xf32>
    %104 = vector.extract_strided_slice %67 {offsets = [0, 127], sizes = [8, 1], strides = [1, 1]} : vector<8x128xf32> to vector<8x1xf32>
    %105 = arith.subf %103, %104 : vector<8x1xf32>
    %106 = arith.mulf %105, %105 : vector<8x1xf32>
    %107 = arith.addf %57, %106 : vector<8x1xf32>
    %108 = vector.extract_strided_slice %67 {offsets = [7, 0], sizes = [1, 128], strides = [1, 1]} : vector<8x128xf32> to vector<1x128xf32>
    %c1_57 = arith.constant 1 : index
    %c0_58 = arith.constant 0 : index
    %c0_59 = arith.constant 0 : index
    %109 = vector.load %arg9[%c1_57, %c0_58, %c0_59] : memref<3x1x128xf32, #tpu.memory_space<vmem>>, vector<1x1x128xf32>
    %110 = vector.shape_cast %109 : vector<1x1x128xf32> to vector<1x128xf32>
    %111 = vector.shape_cast %108 : vector<1x128xf32> to vector<1x1x128xf32>
    tpu.vector_store %arg9[%c1_57, %c0_58, %c0_59], %111 {strides = array<i32>} : memref<3x1x128xf32, #tpu.memory_space<vmem>>, vector<1x1x128xf32>,
    %c0_60 = arith.constant 0 : index
    %c2 = arith.constant 2 : index
    %c0_61 = arith.constant 0 : index
    %c0_62 = arith.constant 0 : index
    %112 = vector.load %arg3[%c0_60, %c2, %c0_61, %c0_62] : memref<1x3x8x128xf32, #tpu.memory_space<vmem>>, vector<1x1x8x128xf32>
    %113 = vector.shape_cast %112 : vector<1x1x8x128xf32> to vector<8x128xf32>
    %c0_63 = arith.constant 0 : index
    %c2_64 = arith.constant 2 : index
    %c0_65 = arith.constant 0 : index
    %c0_66 = arith.constant 0 : index
    %114 = vector.load %arg4[%c0_63, %c2_64, %c0_65, %c0_66] : memref<1x3x8x128xf32, #tpu.memory_space<vmem>>, vector<1x1x8x128xf32>
    %115 = vector.shape_cast %114 : vector<1x1x8x128xf32> to vector<8x128xf32>
    %c0_67 = arith.constant 0 : index
    %c2_68 = arith.constant 2 : index
    %c0_69 = arith.constant 0 : index
    %c0_70 = arith.constant 0 : index
    %116 = vector.load %arg5[%c0_67, %c2_68, %c0_69, %c0_70] : memref<1x3x8x128xf32, #tpu.memory_space<vmem>>, vector<1x1x8x128xf32>
    %117 = vector.shape_cast %116 : vector<1x1x8x128xf32> to vector<8x128xf32>
    %c0_71 = arith.constant 0 : index
    %c2_72 = arith.constant 2 : index
    %c0_73 = arith.constant 0 : index
    %c0_74 = arith.constant 0 : index
    %118 = vector.load %arg6[%c0_71, %c2_72, %c0_73, %c0_74] : memref<1x3x8x128xf32, #tpu.memory_space<vmem>>, vector<1x1x8x128xf32>
    %119 = vector.shape_cast %118 : vector<1x1x8x128xf32> to vector<8x128xf32>
    %120 = arith.subf %113, %115 : vector<8x128xf32>
    %121 = arith.subf %117, %119 : vector<8x128xf32>
    %122 = arith.cmpf olt, %119, %117 : vector<8x128xf32>
    %cst_75 = arith.constant 0.699999988 : f32
    %cst_76 = arith.constant 3.000000e-01 : f32
    %123 = vector.broadcast %cst_75 : f32 to vector<8x128xf32>
    %124 = vector.broadcast %cst_76 : f32 to vector<8x128xf32>
    %125 = arith.select %122, %123, %124 : vector<8x128xi1>, vector<8x128xf32>
    %126 = arith.mulf %120, %120 : vector<8x128xf32>
    %cst_77 = arith.constant 5.000000e-01 : f32
    %127 = vector.broadcast %cst_77 : f32 to vector<8x128xf32>
    %128 = arith.mulf %127, %11 : vector<8x128xf32>
    %129 = arith.mulf %128, %125 : vector<8x128xf32>
    %130 = arith.mulf %121, %121 : vector<8x128xf32>
    %131 = arith.mulf %129, %130 : vector<8x128xf32>
    %132 = arith.addf %126, %131 : vector<8x128xf32>
    %133 = arith.addf %83, %132 : vector<8x128xf32>
    %134 = vector.extract_strided_slice %117 {offsets = [0, 0], sizes = [1, 128], strides = [1, 1]} : vector<8x128xf32> to vector<1x128xf32>
    %c2_78 = arith.constant 2 : index
    %c0_79 = arith.constant 0 : index
    %c0_80 = arith.constant 0 : index
    %135 = vector.load %arg9[%c2_78, %c0_79, %c0_80] : memref<3x1x128xf32, #tpu.memory_space<vmem>>, vector<1x1x128xf32>
    %136 = vector.shape_cast %135 : vector<1x1x128xf32> to vector<1x128xf32>
    %137 = arith.subf %134, %136 : vector<1x128xf32>
    %c1_i32_81 = arith.constant 1 : i32
    %138 = tpu.dynamic_rotate %117 by %c1_i32_81 dim 0 : vector<8x128xf32>, i32 -> vector<8x128xf32>
    %139 = arith.subf %138, %117 : vector<8x128xf32>
    %140 = arith.mulf %139, %139 : vector<8x128xf32>
    %141 = arith.addf %91, %140 : vector<8x128xf32>
    %142 = vector.extract_strided_slice %117 {offsets = [0, 0], sizes = [1, 128], strides = [1, 1]} : vector<8x128xf32> to vector<1x128xf32>
    %143 = vector.extract_strided_slice %117 {offsets = [7, 0], sizes = [1, 128], strides = [1, 1]} : vector<8x128xf32> to vector<1x128xf32>
    %144 = arith.subf %142, %143 : vector<1x128xf32>
    %145 = arith.mulf %137, %137 : vector<1x128xf32>
    %146 = arith.mulf %144, %144 : vector<1x128xf32>
    %147 = arith.subf %145, %146 : vector<1x128xf32>
    %148 = arith.addf %98, %147 : vector<1x128xf32>
    %c1_i32_82 = arith.constant 1 : i32
    %149 = tpu.dynamic_rotate %117 by %c1_i32_82 dim 1 : vector<8x128xf32>, i32 -> vector<8x128xf32>
    %150 = arith.subf %149, %117 : vector<8x128xf32>
    %151 = arith.mulf %150, %150 : vector<8x128xf32>
    %152 = arith.addf %102, %151 : vector<8x128xf32>
    %153 = vector.extract_strided_slice %117 {offsets = [0, 0], sizes = [8, 1], strides = [1, 1]} : vector<8x128xf32> to vector<8x1xf32>
    %154 = vector.extract_strided_slice %117 {offsets = [0, 127], sizes = [8, 1], strides = [1, 1]} : vector<8x128xf32> to vector<8x1xf32>
    %155 = arith.subf %153, %154 : vector<8x1xf32>
    %156 = arith.mulf %155, %155 : vector<8x1xf32>
    %157 = arith.addf %107, %156 : vector<8x1xf32>
    %158 = vector.extract_strided_slice %117 {offsets = [7, 0], sizes = [1, 128], strides = [1, 1]} : vector<8x128xf32> to vector<1x128xf32>
    %c2_83 = arith.constant 2 : index
    %c0_84 = arith.constant 0 : index
    %c0_85 = arith.constant 0 : index
    %159 = vector.load %arg9[%c2_83, %c0_84, %c0_85] : memref<3x1x128xf32, #tpu.memory_space<vmem>>, vector<1x1x128xf32>
    %160 = vector.shape_cast %159 : vector<1x1x128xf32> to vector<1x128xf32>
    %161 = vector.shape_cast %158 : vector<1x128xf32> to vector<1x1x128xf32>
    tpu.vector_store %arg9[%c2_83, %c0_84, %c0_85], %161 {strides = array<i32>} : memref<3x1x128xf32, #tpu.memory_space<vmem>>, vector<1x1x128xf32>,
    %c0_86 = arith.constant 0 : index
    %c0_87 = arith.constant 0 : index
    %c0_88 = arith.constant 0 : index
    %c0_89 = arith.constant 0 : index
    %c0_90 = arith.constant 0 : index
    %162 = vector.load %arg8[%c0_86, %c0_87, %c0_88, %c0_89, %c0_90] : memref<1x1x3x8x128xf32, #tpu.memory_space<vmem>>, vector<1x1x1x8x128xf32>
    %163 = vector.shape_cast %162 : vector<1x1x1x8x128xf32> to vector<8x128xf32>
    %164 = arith.addf %163, %133 : vector<8x128xf32>
    %c0_91 = arith.constant 0 : index
    %c0_92 = arith.constant 0 : index
    %c0_93 = arith.constant 0 : index
    %c0_94 = arith.constant 0 : index
    %c0_95 = arith.constant 0 : index
    %165 = vector.load %arg8[%c0_91, %c0_92, %c0_93, %c0_94, %c0_95] : memref<1x1x3x8x128xf32, #tpu.memory_space<vmem>>, vector<1x1x1x8x128xf32>
    %166 = vector.shape_cast %165 : vector<1x1x1x8x128xf32> to vector<8x128xf32>
    %167 = vector.shape_cast %164 : vector<8x128xf32> to vector<1x1x1x8x128xf32>
    tpu.vector_store %arg8[%c0_91, %c0_92, %c0_93, %c0_94, %c0_95], %167 {strides = array<i32>} : memref<1x1x3x8x128xf32, #tpu.memory_space<vmem>>, vector<1x1x1x8x128xf32>,
    %c0_96 = arith.constant 0 : index
    %c0_97 = arith.constant 0 : index
    %c1_98 = arith.constant 1 : index
    %c0_99 = arith.constant 0 : index
    %c0_100 = arith.constant 0 : index
    %168 = vector.load %arg8[%c0_96, %c0_97, %c1_98, %c0_99, %c0_100] : memref<1x1x3x8x128xf32, #tpu.memory_space<vmem>>, vector<1x1x1x8x128xf32>
    %169 = vector.shape_cast %168 : vector<1x1x1x8x128xf32> to vector<8x128xf32>
    %170 = arith.addf %169, %141 : vector<8x128xf32>
    %c0_i32_101 = arith.constant 0 : i32
    %171 = vector.broadcast %c0_i32_101 : i32 to vector<8x128xi32>
    %172 = arith.cmpi eq, %3, %171 : vector<8x128xi32>
    %cst_102 = arith.constant 0.000000e+00 : f32
    %173 = vector.shape_cast %148 : vector<1x128xf32> to vector<1x128xf32>
    %174 = vector.broadcast %173 : vector<1x128xf32> to vector<8x128xf32>
    %175 = vector.broadcast %cst_102 : f32 to vector<8x128xf32>
    %176 = arith.select %172, %174, %175 : vector<8x128xi1>, vector<8x128xf32>
    %177 = arith.addf %170, %176 : vector<8x128xf32>
    %c0_103 = arith.constant 0 : index
    %c0_104 = arith.constant 0 : index
    %c1_105 = arith.constant 1 : index
    %c0_106 = arith.constant 0 : index
    %c0_107 = arith.constant 0 : index
    %178 = vector.load %arg8[%c0_103, %c0_104, %c1_105, %c0_106, %c0_107] : memref<1x1x3x8x128xf32, #tpu.memory_space<vmem>>, vector<1x1x1x8x128xf32>
    %179 = vector.shape_cast %178 : vector<1x1x1x8x128xf32> to vector<8x128xf32>
    %180 = vector.shape_cast %177 : vector<8x128xf32> to vector<1x1x1x8x128xf32>
    tpu.vector_store %arg8[%c0_103, %c0_104, %c1_105, %c0_106, %c0_107], %180 {strides = array<i32>} : memref<1x1x3x8x128xf32, #tpu.memory_space<vmem>>, vector<1x1x1x8x128xf32>,
    %c0_108 = arith.constant 0 : index
    %c0_109 = arith.constant 0 : index
    %c2_110 = arith.constant 2 : index
    %c0_111 = arith.constant 0 : index
    %c0_112 = arith.constant 0 : index
    %181 = vector.load %arg8[%c0_108, %c0_109, %c2_110, %c0_111, %c0_112] : memref<1x1x3x8x128xf32, #tpu.memory_space<vmem>>, vector<1x1x1x8x128xf32>
    %182 = vector.shape_cast %181 : vector<1x1x1x8x128xf32> to vector<8x128xf32>
    %183 = arith.addf %182, %152 : vector<8x128xf32>
    %c0_i32_113 = arith.constant 0 : i32
    %184 = vector.broadcast %c0_i32_113 : i32 to vector<8x128xi32>
    %185 = arith.cmpi eq, %4, %184 : vector<8x128xi32>
    %cst_114 = arith.constant 0.000000e+00 : f32
    %186 = vector.shape_cast %157 : vector<8x1xf32> to vector<8x1xf32>
    %187 = vector.broadcast %186 : vector<8x1xf32> to vector<8x128xf32>
    %188 = vector.broadcast %cst_114 : f32 to vector<8x128xf32>
    %189 = arith.select %185, %187, %188 : vector<8x128xi1>, vector<8x128xf32>
    %190 = arith.subf %183, %189 : vector<8x128xf32>
    %c0_115 = arith.constant 0 : index
    %c0_116 = arith.constant 0 : index
    %c2_117 = arith.constant 2 : index
    %c0_118 = arith.constant 0 : index
    %c0_119 = arith.constant 0 : index
    %191 = vector.load %arg8[%c0_115, %c0_116, %c2_117, %c0_118, %c0_119] : memref<1x1x3x8x128xf32, #tpu.memory_space<vmem>>, vector<1x1x1x8x128xf32>
    %192 = vector.shape_cast %191 : vector<1x1x1x8x128xf32> to vector<8x128xf32>
    %193 = vector.shape_cast %190 : vector<8x128xf32> to vector<1x1x1x8x128xf32>
    tpu.vector_store %arg8[%c0_115, %c0_116, %c2_117, %c0_118, %c0_119], %193 {strides = array<i32>} : memref<1x1x3x8x128xf32, #tpu.memory_space<vmem>>, vector<1x1x1x8x128xf32>,
    return
  }
  func.func @transform_0(%arg0: i32, %arg1: i32, %arg2: i32) -> (i32, i32, i32, i32) {
    %c2_i32 = arith.constant 2 : i32
    %0 = arith.muli %arg1, %c2_i32 : i32
    %1 = arith.addi %0, %arg2 : i32
    %c0_i32 = arith.constant 0 : i32
    %c0_i32_0 = arith.constant 0 : i32
    %c0_i32_1 = arith.constant 0 : i32
    return %arg0, %c0_i32, %1, %c0_i32_0 : i32, i32, i32, i32
  }
  func.func @transform_1(%arg0: i32, %arg1: i32, %arg2: i32) -> (i32, i32, i32, i32) {
    %c2_i32 = arith.constant 2 : i32
    %0 = arith.muli %arg1, %c2_i32 : i32
    %1 = arith.addi %0, %arg2 : i32
    %c0_i32 = arith.constant 0 : i32
    %c0_i32_0 = arith.constant 0 : i32
    %c0_i32_1 = arith.constant 0 : i32
    return %arg0, %c0_i32, %1, %c0_i32_0 : i32, i32, i32, i32
  }
  func.func @transform_2(%arg0: i32, %arg1: i32, %arg2: i32) -> (i32, i32, i32, i32) {
    %c2_i32 = arith.constant 2 : i32
    %0 = arith.muli %arg1, %c2_i32 : i32
    %1 = arith.addi %0, %arg2 : i32
    %c0_i32 = arith.constant 0 : i32
    %c0_i32_0 = arith.constant 0 : i32
    %c0_i32_1 = arith.constant 0 : i32
    return %arg0, %c0_i32, %1, %c0_i32_0 : i32, i32, i32, i32
  }
  func.func @transform_3(%arg0: i32, %arg1: i32, %arg2: i32) -> (i32, i32, i32, i32) {
    %c2_i32 = arith.constant 2 : i32
    %0 = arith.muli %arg1, %c2_i32 : i32
    %1 = arith.addi %0, %arg2 : i32
    %c0_i32 = arith.constant 0 : i32
    %c0_i32_0 = arith.constant 0 : i32
    %c0_i32_1 = arith.constant 0 : i32
    return %arg0, %c0_i32, %1, %c0_i32_0 : i32, i32, i32, i32
  }
  func.func @transform_4(%arg0: i32, %arg1: i32, %arg2: i32) -> (i32, i32, i32, i32) {
    %c2_i32 = arith.constant 2 : i32
    %0 = arith.muli %arg1, %c2_i32 : i32
    %1 = arith.addi %0, %arg2 : i32
    %c0_i32 = arith.constant 0 : i32
    %c0_i32_0 = arith.constant 0 : i32
    %c0_i32_1 = arith.constant 0 : i32
    return %arg0, %c0_i32, %1, %c0_i32_0 : i32, i32, i32, i32
  }
  func.func @transform_5(%arg0: i32, %arg1: i32, %arg2: i32) -> (i32, i32, i32, i32, i32) {
    %c0_i32 = arith.constant 0 : i32
    %c0_i32_0 = arith.constant 0 : i32
    %c0_i32_1 = arith.constant 0 : i32
    %c0_i32_2 = arith.constant 0 : i32
    return %arg0, %arg1, %c0_i32, %c0_i32_0, %c0_i32_1 : i32, i32, i32, i32, i32
  }
}

</mosaic_0001>

<llo_original>
// kernel: tpu_custom_call.1
$region0: #{tpu_custom_call.1}
  #allocation0 [shape = 'u32[]', space=smem, size = 0x4, offset = 0x4, fixed_abs, tag = 'smem constant byte address 0x4 - core index']
  #allocation1 [shape = 'u32[144,128]{1,0:T(1,128)}', space=vmem, size = 0x12000, scoped, tag = 'internal scratch']
  #allocation2 [shape = 'f32[3,1,128]{2,1,0:T(1,128)}', space=vmem, size = 0x600, scoped, tag = 'scratch operand']
  %s0 = inlined_call_operand.hbm [shape: f32[2,3,16,128], index: 0, kind: input, shape index: {}]
  %s1 = inlined_call_operand.hbm [shape: f32[2,3,16,128], index: 1, kind: input, shape index: {}]
  %s2 = inlined_call_operand.hbm [shape: f32[2,3,16,128], index: 2, kind: input, shape index: {}]
  %s3 = inlined_call_operand.hbm [shape: f32[2,3,16,128], index: 3, kind: input, shape index: {}]
  %s4 = inlined_call_operand.hbm [shape: f32[2,1,16,128], index: 4, kind: input, shape index: {}]
  %s5 = inlined_call_operand.hbm [shape: f32[2,1,3,8,128], index: 5, kind: output, shape index: {}]
  %s6 = sld [smem:[#allocation0]]
  $region77: #{tpu_custom_call.1} parent=0
    _
  %s8 = ssub.s32 1, %s6
  %s9 = scalar_select 0, %s8, %s6
  $region1: #{tpu_custom_call.1} parent=0
    #allocation3 [shape = 'u8[24576]{0}', space=vmem, size = 0x6000, scoped, tag = 'input window, operand 0']
    #allocation4 [shape = 's32[2]{0}', space=sflag, size = 0x8, scoped, tag = 'scoped memory for tpu_custom_call.1']
    #allocation5 [shape = 's32[2]{0}', space=sflag, size = 0x8, scoped, tag = 'scoped memory for tpu_custom_call.1']
    #allocation6 [shape = 'u8[24576]{0}', space=vmem, size = 0x6000, scoped, tag = 'input window, operand 1']
    #allocation7 [shape = 's32[2]{0}', space=sflag, size = 0x8, scoped, tag = 'scoped memory for tpu_custom_call.1']
    #allocation8 [shape = 'u8[24576]{0}', space=vmem, size = 0x6000, scoped, tag = 'input window, operand 2']
    #allocation9 [shape = 'u8[24576]{0}', space=vmem, size = 0x6000, scoped, tag = 'input window, operand 3']
    #allocation10 [shape = 's32[2]{0}', space=sflag, size = 0x8, scoped, tag = 'scoped memory for tpu_custom_call.1']
    #allocation11 [shape = 'u8[8192]{0}', space=vmem, size = 0x2000, scoped, tag = 'input window, operand 4']
    #allocation12 [shape = 'u8[24576]{0}', space=vmem, size = 0x6000, scoped, tag = 'output window, operand 0']
    %10 = vsyncpa [#allocation4], 0
    %s11 = scalar_lea.sflag [#allocation4], 1
    %12 = vsyncpa %s11, 0
    %13 = vsyncpa [#allocation7], 0
    %s14 = scalar_lea.sflag [#allocation7], 1
    %15 = vsyncpa %s14, 0
    %16 = vsyncpa [#allocation10], 0
    %s17 = scalar_lea.sflag [#allocation10], 1
    %18 = vsyncpa %s17, 0
    %19 = vsyncpa [#allocation5], 0
    %s20 = scalar_lea.sflag [#allocation5], 1
    %21 = vsyncpa %s20, 0
    loop: start=0, step=1, limit=6
    $region2: #{tpu_custom_call.1} parent=1 // loop_pre_header
      _
    $region3: #{tpu_custom_call.1} parent=1 // loop_header
      %s23 = sphi 0, %s27
      %p24 = scmp.ge.s32.totalorder %s23, 6
      %s30 = sphi 0, %s49
      %s31 = sphi 0, %s45
      %s32 = sphi 0, %s41
      %s33 = sphi 0, %s30
      %s34 = sphi 0, %s31
      %s35 = sphi 0, %s32
      %s36 = sphi 0, %s33
      %s37 = sphi 0, %s34
      %s38 = sphi 0, %s35
      %s58 = sphi 0, %s60
      %s61 = sphi 0, %s58
      %s62 = sphi 0, %s61
      %s78 = sphi 0, %s62
      %s90 = sphi 0, %s92
      %s93 = sphi 0, %s90
      %s94 = sphi 0, %s93
      %s110 = sphi 0, %s94
      %s122 = sphi 0, %s124
      %s125 = sphi 0, %s122
      %s126 = sphi 0, %s125
      %s142 = sphi 0, %s126
      %s154 = sphi 0, %s156
      %s157 = sphi 0, %s154
      %s158 = sphi 0, %s157
      %s174 = sphi 0, %s158
      %s186 = sphi 0, %s188
      %s189 = sphi 0, %s186
      %s190 = sphi 0, %s189
      %s206 = sphi 0, %s190
      %s214 = sphi 0, %s216
      %s217 = sphi 0, %s214
      %s218 = sphi 0, %s217
      %s234 = sphi 0, %s218
    $region4: #{tpu_custom_call.1} parent=1 // loop_header_branch
      %26 = sbr.rel (%p24) target = $region8
    $region5: #{tpu_custom_call.1} parent=1 // loop_body
      %s28 = ssub.s32 %s23, 1
      %s29 = ssub.s32 %s23, 2
      %s39 = sadd.s32 1, %s32
      %p40 = scmp.ge.s32.totalorder %s39, 2
      %s41 = scalar_select %p40, 0, %s39
      %s42 = sadd.s32 1, %s31
      %s43 = scalar_select %p40, %s42, %s31
      %p44 = scmp.ge.s32.totalorder %s43, 1
      %s45 = scalar_select %p44, 0, %s43
      %s46 = sadd.s32 1, %s30
      %s47 = scalar_select %p44, %s46, %s30
      %p48 = scmp.ge.s32.totalorder %s47, 2
      %s49 = scalar_select %p48, 0, %s47
      %s50 = smul.u32 %s31, 2
      %s51 = sadd.s32 %s50, %s32
      %s52 = smul.u32 %s45, 2
      %s53 = sadd.s32 %s52, %s41
      %s54 = ssub.s32 %s30, %s49
      %s55 = ssub.s32 %s51, %s53
      %s56 = sor.u32 %s54, %s55
      %p57 = scmp.eq.s32.totalorder %s56, 0
      %s59 = sadd.s32 %s58, 1
      %s60 = scalar_select %p57, %s58, %s59
      %p63 = pneg %p57
      %p64 = scmp.eq.s32.totalorder %s23, 3
      %p65 = por %p63, %p64
      %p66 = scmp.ne.s32.totalorder %s58, %s61
      %p67 = scmp.eq.s32.totalorder %s23, 0
      %p68 = por %p66, %p67
      %p69 = scmp.ne.s32.totalorder %s58, %s61
      %p70 = scmp.eq.s32.totalorder %s28, 3
      %p71 = por %p69, %p70
      %p72 = scmp.ne.s32.totalorder %s61, %s62
      %p73 = scmp.eq.s32.totalorder %s28, 0
      %p74 = por %p72, %p73
      %p75 = scmp.ne.s32.totalorder %s61, %s62
      %p76 = scmp.eq.s32.totalorder %s29, 3
      %p77 = por %p75, %p76
      %p79 = scmp.ne.s32.totalorder %s62, %s78
      %p80 = scmp.eq.s32.totalorder %s29, 0
      %p81 = por %p79, %p80
      %s82 = smul.u32 %s31, 2
      %s83 = sadd.s32 %s82, %s32
      %s84 = smul.u32 %s45, 2
      %s85 = sadd.s32 %s84, %s41
      %s86 = ssub.s32 %s30, %s49
      %s87 = ssub.s32 %s83, %s85
      %s88 = sor.u32 %s86, %s87
      %p89 = scmp.eq.s32.totalorder %s88, 0
      %s91 = sadd.s32 %s90, 1
      %s92 = scalar_select %p89, %s90, %s91
      %p95 = pneg %p89
      %p96 = scmp.eq.s32.totalorder %s23, 3
      %p97 = por %p95, %p96
      %p98 = scmp.ne.s32.totalorder %s90, %s93
      %p99 = scmp.eq.s32.totalorder %s23, 0
      %p100 = por %p98, %p99
      %p101 = scmp.ne.s32.totalorder %s90, %s93
      %p102 = scmp.eq.s32.totalorder %s28, 3
      %p103 = por %p101, %p102
      %p104 = scmp.ne.s32.totalorder %s93, %s94
      %p105 = scmp.eq.s32.totalorder %s28, 0
      %p106 = por %p104, %p105
      %p107 = scmp.ne.s32.totalorder %s93, %s94
      %p108 = scmp.eq.s32.totalorder %s29, 3
      %p109 = por %p107, %p108
      %p111 = scmp.ne.s32.totalorder %s94, %s110
      %p112 = scmp.eq.s32.totalorder %s29, 0
      %p113 = por %p111, %p112
      %s114 = smul.u32 %s31, 2
      %s115 = sadd.s32 %s114, %s32
      %s116 = smul.u32 %s45, 2
      %s117 = sadd.s32 %s116, %s41
      %s118 = ssub.s32 %s30, %s49
      %s119 = ssub.s32 %s115, %s117
      %s120 = sor.u32 %s118, %s119
      %p121 = scmp.eq.s32.totalorder %s120, 0
      %s123 = sadd.s32 %s122, 1
      %s124 = scalar_select %p121, %s122, %s123
      %p127 = pneg %p121
      %p128 = scmp.eq.s32.totalorder %s23, 3
      %p129 = por %p127, %p128
      %p130 = scmp.ne.s32.totalorder %s122, %s125
      %p131 = scmp.eq.s32.totalorder %s23, 0
      %p132 = por %p130, %p131
      %p133 = scmp.ne.s32.totalorder %s122, %s125
      %p134 = scmp.eq.s32.totalorder %s28, 3
      %p135 = por %p133, %p134
      %p136 = scmp.ne.s32.totalorder %s125, %s126
      %p137 = scmp.eq.s32.totalorder %s28, 0
      %p138 = por %p136, %p137
      %p139 = scmp.ne.s32.totalorder %s125, %s126
      %p140 = scmp.eq.s32.totalorder %s29, 3
      %p141 = por %p139, %p140
      %p143 = scmp.ne.s32.totalorder %s126, %s142
      %p144 = scmp.eq.s32.totalorder %s29, 0
      %p145 = por %p143, %p144
      %s146 = smul.u32 %s31, 2
      %s147 = sadd.s32 %s146, %s32
      %s148 = smul.u32 %s45, 2
      %s149 = sadd.s32 %s148, %s41
      %s150 = ssub.s32 %s30, %s49
      %s151 = ssub.s32 %s147, %s149
      %s152 = sor.u32 %s150, %s151
      %p153 = scmp.eq.s32.totalorder %s152, 0
      %s155 = sadd.s32 %s154, 1
      %s156 = scalar_select %p153, %s154, %s155
      %p159 = pneg %p153
      %p160 = scmp.eq.s32.totalorder %s23, 3
      %p161 = por %p159, %p160
      %p162 = scmp.ne.s32.totalorder %s154, %s157
      %p163 = scmp.eq.s32.totalorder %s23, 0
      %p164 = por %p162, %p163
      %p165 = scmp.ne.s32.totalorder %s154, %s157
      %p166 = scmp.eq.s32.totalorder %s28, 3
      %p167 = por %p165, %p166
      %p168 = scmp.ne.s32.totalorder %s157, %s158
      %p169 = scmp.eq.s32.totalorder %s28, 0
      %p170 = por %p168, %p169
      %p171 = scmp.ne.s32.totalorder %s157, %s158
      %p172 = scmp.eq.s32.totalorder %s29, 3
      %p173 = por %p171, %p172
      %p175 = scmp.ne.s32.totalorder %s158, %s174
      %p176 = scmp.eq.s32.totalorder %s29, 0
      %p177 = por %p175, %p176
      %s178 = smul.u32 %s31, 2
      %s179 = sadd.s32 %s178, %s32
      %s180 = smul.u32 %s45, 2
      %s181 = sadd.s32 %s180, %s41
      %s182 = ssub.s32 %s30, %s49
      %s183 = ssub.s32 %s179, %s181
      %s184 = sor.u32 %s182, %s183
      %p185 = scmp.eq.s32.totalorder %s184, 0
      %s187 = sadd.s32 %s186, 1
      %s188 = scalar_select %p185, %s186, %s187
      %p191 = pneg %p185
      %p192 = scmp.eq.s32.totalorder %s23, 3
      %p193 = por %p191, %p192
      %p194 = scmp.ne.s32.totalorder %s186, %s189
      %p195 = scmp.eq.s32.totalorder %s23, 0
      %p196 = por %p194, %p195
      %p197 = scmp.ne.s32.totalorder %s186, %s189
      %p198 = scmp.eq.s32.totalorder %s28, 3
      %p199 = por %p197, %p198
      %p200 = scmp.ne.s32.totalorder %s189, %s190
      %p201 = scmp.eq.s32.totalorder %s28, 0
      %p202 = por %p200, %p201
      %p203 = scmp.ne.s32.totalorder %s189, %s190
      %p204 = scmp.eq.s32.totalorder %s29, 3
      %p205 = por %p203, %p204
      %p207 = scmp.ne.s32.totalorder %s190, %s206
      %p208 = scmp.eq.s32.totalorder %s29, 0
      %p209 = por %p207, %p208
      %s210 = ssub.s32 %s30, %s49
      %s211 = ssub.s32 %s31, %s45
      %s212 = sor.u32 %s210, %s211
      %p213 = scmp.eq.s32.totalorder %s212, 0
      %s215 = sadd.s32 %s214, 1
      %s216 = scalar_select %p213, %s214, %s215
      %p219 = pneg %p213
      %p220 = scmp.eq.s32.totalorder %s23, 3
      %p221 = por %p219, %p220
      %p222 = scmp.ne.s32.totalorder %s214, %s217
      %p223 = scmp.eq.s32.totalorder %s23, 0
      %p224 = por %p222, %p223
      %p225 = scmp.ne.s32.totalorder %s214, %s217
      %p226 = scmp.eq.s32.totalorder %s28, 3
      %p227 = por %p225, %p226
      %p228 = scmp.ne.s32.totalorder %s217, %s218
      %p229 = scmp.eq.s32.totalorder %s28, 0
      %p230 = por %p228, %p229
      %p231 = scmp.ne.s32.totalorder %s217, %s218
      %p232 = scmp.eq.s32.totalorder %s29, 3
      %p233 = por %p231, %p232
      %p235 = scmp.ne.s32.totalorder %s218, %s234
      %p236 = scmp.eq.s32.totalorder %s29, 0
      %p237 = por %p235, %p236
      %p238 = scmp.le.s32.totalorder 1, %s23
      %p239 = scmp.lt.s32.totalorder %s23, 5
      %p240 = pnand %p238, %p239
      %p241 = pneg %p240
      // Predicated region
      $region9: #{tpu_custom_call.1} parent=5 // pred_check
        _
      $region10: #{tpu_custom_call.1} parent=5 // pred_check_branch
        %243 = sbr.rel (%p240) target = $region12
      $region11: #{tpu_custom_call.1} parent=5 // pred_region
        %s244 = ssub.s32 %s23, 1
      $region12: #{tpu_custom_call.1} parent=5 // pred_fallthru
        _
      %p245 = scmp.lt.s32.totalorder %s23, 4
      // Predicated region
      $region13: #{tpu_custom_call.1} parent=5 // pred_check
        %p246 = pneg %p245
      $region14: #{tpu_custom_call.1} parent=5 // pred_check_branch
        %248 = sbr.rel (%p246) target = $region16
      $region15: #{tpu_custom_call.1} parent=5 // pred_region
        // Predicated region
        $region17: #{tpu_custom_call.1} parent=15 // pred_check
          %p249 = pneg %p68
        $region18: #{tpu_custom_call.1} parent=15 // pred_check_branch
          %251 = sbr.rel (%p249) target = $region20
        $region19: #{tpu_custom_call.1} parent=15 // pred_region
          %s252 = sand.u32 %s58, 1
          %s253 = scalar_lea.sflag [#allocation4], %s252
          %s254 = sand.u32 %s58, 1
          %s255 = smul.addr %s254, 24
          %s256 = scalar_lea.vmem [#allocation3], %s255
          %s257 = smul.u32 %s31, 2
          %s258 = sadd.s32 %s257, %s32
          %s260 = ssub.s32 384, 384
          %261 = vsyncadd %s253, %s260
          %s262 = smul.addr %s30, 6
          %s263 = sadd.s32 %s258, %s262
          %s264 = smul.addr %s263, 128
          %s265 = scalar_lea.hbm %s0, %s264
          %s266 = sshll.u32 %s256, 4
          %s267 = int_to_ptr.vmem [resolvable:$true] %s266
          %272 = dma.hbm_to_vmem [thread:$0]  %s265, 384, %s267, %s253, 256, 128, 8
        $region20: #{tpu_custom_call.1} parent=15 // pred_fallthru
          _
        // Predicated region
        $region21: #{tpu_custom_call.1} parent=15 // pred_check
          %p273 = pneg %p100
        $region22: #{tpu_custom_call.1} parent=15 // pred_check_branch
          %275 = sbr.rel (%p273) target = $region24
        $region23: #{tpu_custom_call.1} parent=15 // pred_region
          %s276 = sand.u32 %s23, 1
          %s277 = scalar_lea.sflag [#allocation7], %s276
          %s278 = sand.u32 %s90, 1
          %s279 = smul.addr %s278, 24
          %s280 = scalar_lea.vmem [#allocation6], %s279
          %s281 = smul.u32 %s31, 2
          %s282 = sadd.s32 %s281, %s32
          %s284 = ssub.s32 384, 384
          %285 = vsyncadd %s277, %s284
          %s286 = smul.addr %s30, 6
          %s287 = sadd.s32 %s282, %s286
          %s288 = smul.addr %s287, 128
          %s289 = scalar_lea.hbm %s1, %s288
          %s290 = sshll.u32 %s280, 4
          %s291 = int_to_ptr.vmem [resolvable:$true] %s290
          %296 = dma.hbm_to_vmem [thread:$0]  %s289, 384, %s291, %s277, 256, 128, 8
        $region24: #{tpu_custom_call.1} parent=15 // pred_fallthru
          _
        // Predicated region
        $region25: #{tpu_custom_call.1} parent=15 // pred_check
          %p297 = pneg %p132
        $region26: #{tpu_custom_call.1} parent=15 // pred_check_branch
          %299 = sbr.rel (%p297) target = $region28
        $region27: #{tpu_custom_call.1} parent=15 // pred_region
          %s300 = sand.u32 %s23, 1
          %s301 = scalar_lea.sflag [#allocation7], %s300
          %s302 = sand.u32 %s122, 1
          %s303 = smul.addr %s302, 24
          %s304 = scalar_lea.vmem [#allocation8], %s303
          %s305 = smul.u32 %s31, 2
          %s306 = sadd.s32 %s305, %s32
          %s308 = ssub.s32 384, 384
          %309 = vsyncadd %s301, %s308
          %s310 = smul.addr %s30, 6
          %s311 = sadd.s32 %s306, %s310
          %s312 = smul.addr %s311, 128
          %s313 = scalar_lea.hbm %s2, %s312
          %s314 = sshll.u32 %s304, 4
          %s315 = int_to_ptr.vmem [resolvable:$true] %s314
          %320 = dma.hbm_to_vmem [thread:$0]  %s313, 384, %s315, %s301, 256, 128, 8
        $region28: #{tpu_custom_call.1} parent=15 // pred_fallthru
          _
        // Predicated region
        $region29: #{tpu_custom_call.1} parent=15 // pred_check
          %p321 = pneg %p164
        $region30: #{tpu_custom_call.1} parent=15 // pred_check_branch
          %323 = sbr.rel (%p321) target = $region32
        $region31: #{tpu_custom_call.1} parent=15 // pred_region
          %s324 = sand.u32 %s23, 1
          %s325 = scalar_lea.sflag [#allocation10], %s324
          %s326 = sand.u32 %s154, 1
          %s327 = smul.addr %s326, 24
          %s328 = scalar_lea.vmem [#allocation9], %s327
          %s329 = smul.u32 %s31, 2
          %s330 = sadd.s32 %s329, %s32
          %s332 = ssub.s32 384, 384
          %333 = vsyncadd %s325, %s332
          %s334 = smul.addr %s30, 6
          %s335 = sadd.s32 %s330, %s334
          %s336 = smul.addr %s335, 128
          %s337 = scalar_lea.hbm %s3, %s336
          %s338 = sshll.u32 %s328, 4
          %s339 = int_to_ptr.vmem [resolvable:$true] %s338
          %344 = dma.hbm_to_vmem [thread:$0]  %s337, 384, %s339, %s325, 256, 128, 8
        $region32: #{tpu_custom_call.1} parent=15 // pred_fallthru
          _
        // Predicated region
        $region33: #{tpu_custom_call.1} parent=15 // pred_check
          %p345 = pneg %p196
        $region34: #{tpu_custom_call.1} parent=15 // pred_check_branch
          %347 = sbr.rel (%p345) target = $region36
        $region35: #{tpu_custom_call.1} parent=15 // pred_region
          %s348 = sand.u32 %s23, 1
          %s349 = scalar_lea.sflag [#allocation10], %s348
          %s350 = sand.u32 %s186, 1
          %s351 = smul.addr %s350, 8
          %s352 = scalar_lea.vmem [#allocation11], %s351
          %s353 = smul.u32 %s31, 2
          %s354 = sadd.s32 %s353, %s32
          %s356 = ssub.s32 128, 128
          %357 = vsyncadd %s349, %s356
          %s358 = smul.addr %s30, 2
          %s359 = sadd.s32 %s354, %s358
          %s360 = smul.addr %s359, 128
          %s361 = scalar_lea.hbm %s4, %s360
          %s363 = sshll.u32 %s352, 4
          %s364 = int_to_ptr.vmem [resolvable:$true] %s363
          %366 = dma.hbm_to_vmem [thread:$0]  %s361, 128, %s364, %s349
        $region36: #{tpu_custom_call.1} parent=15 // pred_fallthru
          _
      $region16: #{tpu_custom_call.1} parent=5 // pred_fallthru
        _
      %p367 = scmp.le.s32.totalorder 1, %s23
      %p368 = scmp.lt.s32.totalorder %s23, 5
      %p369 = pnand %p367, %p368
      %p370 = pneg %p369
      // Predicated region
      $region37: #{tpu_custom_call.1} parent=5 // pred_check
        _
      $region38: #{tpu_custom_call.1} parent=5 // pred_check_branch
        %372 = sbr.rel (%p369) target = $region40
      $region39: #{tpu_custom_call.1} parent=5 // pred_region
        %s373 = ssub.s32 %s23, 1
        %s374 = sand.u32 %s61, 1
        %s375 = scalar_lea.sflag [#allocation4], %s374
        %s376 = sand.u32 %s61, 1
        %s377 = smul.addr %s376, 24
        %s378 = scalar_lea.vmem [#allocation3], %s377
        // Predicated region
        $region41: #{tpu_custom_call.1} parent=39 // pred_check
          %p379 = pneg %p74
        $region42: #{tpu_custom_call.1} parent=39 // pred_check_branch
          %381 = sbr.rel (%p379) target = $region44
        $region43: #{tpu_custom_call.1} parent=39 // pred_region
          %382 = dma.done %s375, 384
        $region44: #{tpu_custom_call.1} parent=39 // pred_fallthru
          _
        %s383 = sand.u32 %s28, 1
        %s384 = scalar_lea.sflag [#allocation7], %s383
        %s385 = sand.u32 %s93, 1
        %s386 = smul.addr %s385, 24
        %s387 = scalar_lea.vmem [#allocation6], %s386
        // Predicated region
        $region45: #{tpu_custom_call.1} parent=39 // pred_check
          %p388 = pneg %p106
        $region46: #{tpu_custom_call.1} parent=39 // pred_check_branch
          %390 = sbr.rel (%p388) target = $region48
        $region47: #{tpu_custom_call.1} parent=39 // pred_region
          %391 = dma.done %s384, 384
        $region48: #{tpu_custom_call.1} parent=39 // pred_fallthru
          _
        %s392 = sand.u32 %s28, 1
        %s393 = scalar_lea.sflag [#allocation7], %s392
        %s394 = sand.u32 %s125, 1
        %s395 = smul.addr %s394, 24
        %s396 = scalar_lea.vmem [#allocation8], %s395
        // Predicated region
        $region49: #{tpu_custom_call.1} parent=39 // pred_check
          %p397 = pneg %p138
        $region50: #{tpu_custom_call.1} parent=39 // pred_check_branch
          %399 = sbr.rel (%p397) target = $region52
        $region51: #{tpu_custom_call.1} parent=39 // pred_region
          %400 = dma.done %s393, 384
        $region52: #{tpu_custom_call.1} parent=39 // pred_fallthru
          _
        %s401 = sand.u32 %s28, 1
        %s402 = scalar_lea.sflag [#allocation10], %s401
        %s403 = sand.u32 %s157, 1
        %s404 = smul.addr %s403, 24
        %s405 = scalar_lea.vmem [#allocation9], %s404
        // Predicated region
        $region53: #{tpu_custom_call.1} parent=39 // pred_check
          %p406 = pneg %p170
        $region54: #{tpu_custom_call.1} parent=39 // pred_check_branch
          %408 = sbr.rel (%p406) target = $region56
        $region55: #{tpu_custom_call.1} parent=39 // pred_region
          %409 = dma.done %s402, 384
        $region56: #{tpu_custom_call.1} parent=39 // pred_fallthru
          _
        %s410 = sand.u32 %s28, 1
        %s411 = scalar_lea.sflag [#allocation10], %s410
        %s412 = sand.u32 %s189, 1
        %s413 = smul.addr %s412, 8
        %s414 = scalar_lea.vmem [#allocation11], %s413
        // Predicated region
        $region57: #{tpu_custom_call.1} parent=39 // pred_check
          %p415 = pneg %p202
        $region58: #{tpu_custom_call.1} parent=39 // pred_check_branch
          %417 = sbr.rel (%p415) target = $region60
        $region59: #{tpu_custom_call.1} parent=39 // pred_region
          %418 = dma.done %s411, 128
        $region60: #{tpu_custom_call.1} parent=39 // pred_fallthru
          _
        %s419 = sand.u32 %s61, 1
        %s420 = scalar_lea.sflag [#allocation4], %s419
        %s421 = sand.u32 %s61, 1
        %s422 = smul.addr %s421, 24
        %s423 = scalar_lea.vmem [#allocation3], %s422
        %p424 = pneg %p74
        %p425 = pneg %p71
        %s426 = sand.u32 %s28, 1
        %s427 = scalar_lea.sflag [#allocation7], %s426
        %s428 = sand.u32 %s93, 1
        %s429 = smul.addr %s428, 24
        %s430 = scalar_lea.vmem [#allocation6], %s429
        %p431 = pneg %p106
        %p432 = pneg %p103
        %s433 = sand.u32 %s28, 1
        %s434 = scalar_lea.sflag [#allocation7], %s433
        %s435 = sand.u32 %s125, 1
        %s436 = smul.addr %s435, 24
        %s437 = scalar_lea.vmem [#allocation8], %s436
        %p438 = pneg %p138
        %p439 = pneg %p135
        %s440 = sand.u32 %s28, 1
        %s441 = scalar_lea.sflag [#allocation10], %s440
        %s442 = sand.u32 %s157, 1
        %s443 = smul.addr %s442, 24
        %s444 = scalar_lea.vmem [#allocation9], %s443
        %p445 = pneg %p170
        %p446 = pneg %p167
        %s447 = sand.u32 %s28, 1
        %s448 = scalar_lea.sflag [#allocation10], %s447
        %s449 = sand.u32 %s189, 1
        %s450 = smul.addr %s449, 8
        %s451 = scalar_lea.vmem [#allocation11], %s450
        %p452 = pneg %p202
        %p453 = pneg %p199
        %p454 = pneg %p230
        %p455 = pneg %p227
        %s456 = sand.u32 %s217, 1
        %s457 = scalar_lea.sflag [#allocation5], %s456
        %s458 = sand.u32 %s217, 1
        %s459 = smul.addr %s458, 24
        %s460 = scalar_lea.vmem [#allocation12], %s459
        %s461 = smul.u32 %s34, 2
        %s462 = sadd.s32 %s461, %s35
        %s463 = smul.u32 %s34, 2
        %s464 = sadd.s32 %s463, %s35
        %s465 = smul.u32 %s34, 2
        %s466 = sadd.s32 %s465, %s35
        %s467 = smul.u32 %s34, 2
        %s468 = sadd.s32 %s467, %s35
        %s469 = smul.u32 %s34, 2
        %s470 = sadd.s32 %s469, %s35
        %p471 = scmp.eq.s32.totalorder %s35, 0
        // Predicated region
        $region61: #{tpu_custom_call.1} parent=39 // pred_check
          %p472 = pneg %p471
        $region62: #{tpu_custom_call.1} parent=39 // pred_check_branch
          %474 = sbr.rel (%p472) target = $region64
        $region63: #{tpu_custom_call.1} parent=39 // pred_region
          %475 = vst [vmem:[%s460] sm:$0xff] 0.0
          %476 = vst [vmem:[%s460 + $0x8] sm:$0xff] 0.0
          %477 = vst [vmem:[%s460 + $0x10] sm:$0xff] 0.0
          %v478 = vld [vmem:[%s396] sm:$0x1]
          %v479 = vld [vmem:[%s396 + $0x8] sm:$0x1]
          %v480 = vld [vmem:[%s396 + $0x10] sm:$0x1]
          %481 = vst [vmem:[#allocation2] sm:$0x1] %v478
          %482 = vst [vmem:[#allocation2 + $0x1] sm:$0x1] %v479
          %483 = vst [vmem:[#allocation2 + $0x2] sm:$0x1] %v480
        $region64: #{tpu_custom_call.1} parent=39 // pred_fallthru
          _
        %v484 = vlaneseq
        %v485 = vshrl.u32 %v484, 7
        %v486 = vlaneseq
        %v487 = vand.u32 %v486, 127
        %v488 = vld [vmem:[%s414] sm:$0xff]
        %v489 = vld [vmem:[%s378] sm:$0xff]
        %v490 = vld [vmem:[%s387] sm:$0xff]
        %v491 = vld [vmem:[%s396] sm:$0xff]
        %v492 = vld [vmem:[%s405] sm:$0xff]
        %v493 = vsub.f32 %v489, %v490
        %v494 = vsub.f32 %v491, %v492
        %vm495 = vcmp.lt.f32.partialorder %v492, %v491
        %v496 = vsel %vm495, 0.7, 0.3
        %v497 = vmul.f32 %v493, %v493
        %v498 = vmul.f32 %v488, 0.5
        %v499 = vmul.f32 %v498, %v496
        %v500 = vmul.f32 %v494, %v494
        %v501 = vmul.f32 %v499, %v500
        %v502 = vadd.f32 %v497, %v501
        %v503 = vadd.f32 %v502, 0.0
        %v504 = vld [vmem:[#allocation2] sm:$0x1]
        %v505 = vsub.f32 %v491, %v504
        %v506 = vrot.slane %v491, 7
        %v507 = vsub.f32 %v506, %v491
        %v508 = vmul.f32 %v507, %v507
        %v509 = vadd.f32 %v508, 0.0
        %v511 = vrot.slane %v491, 7
        %v513 = vsub.f32 %v491, %v511
        %v514 = vmul.f32 %v505, %v505
        %v515 = vmul.f32 %v513, %v513
        %v516 = vsub.f32 %v514, %v515
        %v517 = vadd.f32 %v516, 0.0
        %518 = vrot.lane.b32.xlu0 %v491, 1
        %v519 = vpop.permute.xlu0 %518
        %v520 = vsub.f32 %v519, %v491
        %v521 = vmul.f32 %v520, %v520
        %v522 = vadd.f32 %v521, 0.0
        %523 = vrot.lane.b32.xlu0 %v491, 1
        %v524 = vpop.permute.xlu0 %523
        %v526 = vsub.f32 %v491, %v524
        %v527 = vmul.f32 %v526, %v526
        %v528 = vadd.f32 %v527, 0.0
        %529 = vst [vmem:[#allocation2 - $0x7] sm:$0x80] %v491
        %s530 = scalar_lea.vmem %s378, 8 [#allocation3]
        %v531 = vld [vmem:[%s530] sm:$0xff]
        %s532 = scalar_lea.vmem %s387, 8 [#allocation6]
        %v533 = vld [vmem:[%s532] sm:$0xff]
        %s534 = scalar_lea.vmem %s396, 8 [#allocation8]
        %v535 = vld [vmem:[%s534] sm:$0xff]
        %s536 = scalar_lea.vmem %s405, 8 [#allocation9]
        %v537 = vld [vmem:[%s536] sm:$0xff]
        %v538 = vsub.f32 %v531, %v533
        %v539 = vsub.f32 %v535, %v537
        %vm540 = vcmp.lt.f32.partialorder %v537, %v535
        %v541 = vsel %vm540, 0.7, 0.3
        %v542 = vmul.f32 %v538, %v538
        %v543 = vmul.f32 %v498, %v541
        %v544 = vmul.f32 %v539, %v539
        %v545 = vmul.f32 %v543, %v544
        %v546 = vadd.f32 %v542, %v545
        %v547 = vadd.f32 %v503, %v546
        %s548 = scalar_lea.vmem [#allocation2], 1
        %v549 = vld [vmem:[%s548] sm:$0x1]
        %v550 = vsub.f32 %v535, %v549
        %v551 = vrot.slane %v535, 7
        %v552 = vsub.f32 %v551, %v535
        %v553 = vmul.f32 %v552, %v552
        %v554 = vadd.f32 %v509, %v553
        %v556 = vrot.slane %v535, 7
        %v558 = vsub.f32 %v535, %v556
        %v559 = vmul.f32 %v550, %v550
        %v560 = vmul.f32 %v558, %v558
        %v561 = vsub.f32 %v559, %v560
        %v562 = vadd.f32 %v517, %v561
        %563 = vrot.lane.b32.xlu0 %v535, 1
        %v564 = vpop.permute.xlu0 %563
        %v565 = vsub.f32 %v564, %v535
        %v566 = vmul.f32 %v565, %v565
        %v567 = vadd.f32 %v522, %v566
        %568 = vrot.lane.b32.xlu0 %v535, 1
        %v569 = vpop.permute.xlu0 %568
        %v571 = vsub.f32 %v535, %v569
        %v572 = vmul.f32 %v571, %v571
        %v573 = vadd.f32 %v528, %v572
        %574 = vst [vmem:[%s548 - $0x7] sm:$0x80] %v535
        %s575 = scalar_lea.vmem %s378, 16 [#allocation3]
        %v576 = vld [vmem:[%s575] sm:$0xff]
        %s577 = scalar_lea.vmem %s387, 16 [#allocation6]
        %v578 = vld [vmem:[%s577] sm:$0xff]
        %s579 = scalar_lea.vmem %s396, 16 [#allocation8]
        %v580 = vld [vmem:[%s579] sm:$0xff]
        %s581 = scalar_lea.vmem %s405, 16 [#allocation9]
        %v582 = vld [vmem:[%s581] sm:$0xff]
        %v583 = vsub.f32 %v576, %v578
        %v584 = vsub.f32 %v580, %v582
        %vm585 = vcmp.lt.f32.partialorder %v582, %v580
        %v586 = vsel %vm585, 0.7, 0.3
        %v587 = vmul.f32 %v583, %v583
        %v588 = vmul.f32 %v498, %v586
        %v589 = vmul.f32 %v584, %v584
        %v590 = vmul.f32 %v588, %v589
        %v591 = vadd.f32 %v587, %v590
        %v592 = vadd.f32 %v547, %v591
        %s593 = scalar_lea.vmem [#allocation2], 2
        %v594 = vld [vmem:[%s593] sm:$0x1]
        %v595 = vsub.f32 %v580, %v594
        %v596 = vrot.slane %v580, 7
        %v597 = vsub.f32 %v596, %v580
        %v598 = vmul.f32 %v597, %v597
        %v599 = vadd.f32 %v554, %v598
        %v601 = vrot.slane %v580, 7
        %v603 = vsub.f32 %v580, %v601
        %v604 = vmul.f32 %v595, %v595
        %v605 = vmul.f32 %v603, %v603
        %v606 = vsub.f32 %v604, %v605
        %v607 = vadd.f32 %v562, %v606
        %608 = vrot.lane.b32.xlu0 %v580, 1
        %v609 = vpop.permute.xlu0 %608
        %v610 = vsub.f32 %v609, %v580
        %v611 = vmul.f32 %v610, %v610
        %v612 = vadd.f32 %v567, %v611
        %613 = vrot.lane.b32.xlu0 %v580, 1
        %v614 = vpop.permute.xlu0 %613
        %v616 = vsub.f32 %v580, %v614
        %v617 = vmul.f32 %v616, %v616
        %v618 = vadd.f32 %v573, %v617
        %619 = vst [vmem:[%s593 - $0x7] sm:$0x80] %v580
        %v620 = vld [vmem:[%s460] sm:$0xff]
        %v621 = vadd.f32 %v620, %v592
        %622 = vst [vmem:[%s460] sm:$0xff] %v621
        %s623 = scalar_lea.vmem %s460, 8 [#allocation12]
        %v624 = vld [vmem:[%s623] sm:$0xff]
        %v625 = vadd.f32 %v624, %v599
        %vm626 = vcmp.eq.s32.totalorder %v485, 0
        %v627 = vlaneseq
        %v628 = vshrl.u32 %v627, 7
        %v629 = vsub.s32 0, %v628
        %v630 = vrot.slane %v607, %v629
        %v631 = vsel %vm626, %v630, 0.0
        %v632 = vadd.f32 %v625, %v631
        %633 = vst [vmem:[%s623] sm:$0xff] %v632
        %s634 = scalar_lea.vmem %s460, 16 [#allocation12]
        %v635 = vld [vmem:[%s634] sm:$0xff]
        %v636 = vadd.f32 %v635, %v612
        %vm637 = vcmp.eq.s32.totalorder %v487, 0
        %639 = vset.pattern.permute.xlu0 0
        %640 = vperm.xlu0 %639, %v618
        %v641 = vpop.permute.xlu0 %640
        %v643 = vsel %vm637, %v641, 0.0
        %v644 = vsub.f32 %v636, %v643
        %645 = vst [vmem:[%s634] sm:$0xff] %v644
        %s646 = sand.u32 %s217, 1
        %s647 = scalar_lea.sflag [#allocation5], %s646
        %s648 = sand.u32 %s217, 1
        %s649 = smul.addr %s648, 24
        %s650 = scalar_lea.vmem [#allocation12], %s649
        // Predicated region
        $region65: #{tpu_custom_call.1} parent=39 // pred_check
          %p651 = pneg %p227
        $region66: #{tpu_custom_call.1} parent=39 // pred_check_branch
          %653 = sbr.rel (%p651) target = $region68
        $region67: #{tpu_custom_call.1} parent=39 // pred_region
          %s655 = ssub.s32 384, 384
          %656 = vsyncadd %s647, %s655
          %s657 = smul.addr %s34, 3
          %s658 = smul.addr %s33, 3
          %s659 = sadd.s32 %s657, %s658
          %s660 = smul.addr %s659, 128
          %s661 = scalar_lea.hbm %s5, %s660
          %s662 = sshll.u32 %s650, 4
          %s663 = int_to_ptr.vmem [resolvable:$true] %s662
          %668 = dma.vmem_to_hbm [thread:$0]  %s663, 384, %s661, %s647, 128, 128, 8
        $region68: #{tpu_custom_call.1} parent=39 // pred_fallthru
          _
      $region40: #{tpu_custom_call.1} parent=5 // pred_fallthru
        _
      %p669 = scmp.le.s32.totalorder 2, %s23
      // Predicated region
      $region69: #{tpu_custom_call.1} parent=5 // pred_check
        %p670 = pneg %p669
      $region70: #{tpu_custom_call.1} parent=5 // pred_check_branch
        %672 = sbr.rel (%p670) target = $region72
      $region71: #{tpu_custom_call.1} parent=5 // pred_region
        %s673 = ssub.s32 %s23, 2
        // Predicated region
        $region73: #{tpu_custom_call.1} parent=71 // pred_check
          %p674 = pneg %p233
        $region74: #{tpu_custom_call.1} parent=71 // pred_check_branch
          %676 = sbr.rel (%p674) target = $region76
        $region75: #{tpu_custom_call.1} parent=71 // pred_region
          %s677 = sand.u32 %s218, 1
          %s678 = scalar_lea.sflag [#allocation5], %s677
          %s679 = sand.u32 %s218, 1
          %s680 = smul.addr %s679, 24
          %s681 = scalar_lea.vmem [#allocation12], %s680
          %682 = dma.done %s678, 384
        $region76: #{tpu_custom_call.1} parent=71 // pred_fallthru
          _
      $region72: #{tpu_custom_call.1} parent=5 // pred_fallthru
        _
    $region6: #{tpu_custom_call.1} parent=1 // loop_footer
      %s27 = sadd.s32 1, %s23
    $region7: #{tpu_custom_call.1} parent=1 // loop_footer_branch
      %22 = sbr.rel target = $region3
    $region8: #{tpu_custom_call.1} parent=1 // loop_exit
      _
    %683 = vsyncpa [#allocation4], 1
    %s684 = scalar_lea.sflag [#allocation4], 1
    %685 = vsyncpa %s684, 1
    %686 = vsyncpa [#allocation7], 1
    %s687 = scalar_lea.sflag [#allocation7], 1
    %688 = vsyncpa %s687, 1
    %689 = vsyncpa [#allocation10], 1
    %s690 = scalar_lea.sflag [#allocation10], 1
    %691 = vsyncpa %s690, 1
    %692 = vsyncpa [#allocation5], 1
    %s693 = scalar_lea.sflag [#allocation5], 1
    %694 = vsyncpa %s693, 1

</llo_original>
